<compile_context>
chip_gen: v7x
topology: tpu7x:2x2x1
jax: 0.10.0
libtpu: 0.0.40
codegen_flags: <defaults>
</compile_context>

<pallas_src>
import functools

import jax
import jax.numpy as jnp
from jax.experimental import pallas as pl
from jax.experimental.pallas import tpu as pltpu

D_MODEL = 8            # matches models/Mamba.py
SEQ_LEN_SMALL = 8      # small stand-in for the module's seq_len=100
EPS = 1e-5
LANES = 128

# ~2 MiB per input block (elementwise roofline knee is ~1-4 MiB).  in+out,
# double-buffered, is ~8 MiB: fits v5e's 16 MiB default scoped VMEM and
# v7x's 32 MiB scoped / 64 MiB physical budget without any override.
_DEFAULT_BLOCK_BYTES = 2 << 20
# Cap tiles so big inputs give >= ~4 grid steps: 2 per TensorCore on v7x
# plus DMA/compute overlap everywhere.
_TARGET_GRID_STEPS = 4


def _round_up(a, b):
    return ((a + b - 1) // b) * b


def _sublane_multiple(dtype):
    itemsize = jnp.dtype(dtype).itemsize
    return max(8, 32 // max(itemsize, 1))   # f32 -> 8, bf16 -> 16, int8 -> 32


def _pick_rows_tile(n_rows, row_bytes, sub, block_bytes):
    """Largest multiple-of-`sub` tile <= block_bytes that still yields ~4 steps."""
    rows_from_bytes = max(sub, (block_bytes // row_bytes) // sub * sub)
    rows_from_steps = max(sub, _round_up(pl.cdiv(n_rows, _TARGET_GRID_STEPS), sub))
    rows_tile = min(rows_from_bytes, rows_from_steps)
    if rows_tile >= n_rows:
        rows_tile = n_rows            # single full-extent block (always legal)
    return rows_tile


def _cost(n_elems, d, itemsize):
    # Advisory estimate so XLA schedules neighbors of the custom call well.
    return pl.CostEstimate(flops=4 * n_elems,
                           transcendentals=max(1, n_elems // d),
                           bytes_accessed=2 * n_elems * itemsize)


# --------------------------------------------------------------------------
# Kernels
# --------------------------------------------------------------------------

def _rmsnorm_kernel_flat(x_ref, w_ref, seg_ref, o_ref, *, inv_d, eps):
    """Lane-dense flattened layout.

    x_ref: (rows_tile, 128) where each aligned group of `d` lanes is one
    logical row of the original (..., d) tensor.  seg_ref is the constant
    128x128 block-diagonal ones matrix; dot(x*x, seg) broadcasts every
    group's sum-of-squares back across its `d` lanes (MXU is idle otherwise).
    w_ref is the weight pre-tiled to (1, 128) f32.
    """
    x = x_ref[...].astype(jnp.float32)
    sq_sum = jnp.dot(x * x, seg_ref[...], preferred_element_type=jnp.float32)
    inv = jax.lax.rsqrt(sq_sum * inv_d + eps)          # EUP slot
    o_ref[...] = (x * inv * w_ref[...]).astype(o_ref.dtype)


def _rmsnorm_kernel_rows(x_ref, w_ref, o_ref, *, inv_d, eps):
    """Natural (rows, d) layout (used when d is already lane-dense)."""
    x = x_ref[...].astype(jnp.float32)
    w = w_ref[...].astype(jnp.float32)
    mean_sq = jnp.sum(x * x, axis=-1, keepdims=True) * inv_d
    o_ref[...] = (x * jax.lax.rsqrt(mean_sq + eps) * w).astype(o_ref.dtype)


# --------------------------------------------------------------------------
# Wrappers
# --------------------------------------------------------------------------

def _rmsnorm_flat(x2, weight, eps, block_bytes):
    """Small-d path (128 % d == 0): flattened lane-dense view, no transposes."""
    n_rows, d = x2.shape
    itemsize = jnp.dtype(x2.dtype).itemsize
    n_elems = n_rows * d
    pad = (-n_elems) % LANES
    flat = x2.reshape(-1)                 # contiguous row-major: free reshape
    if pad:
        # TODO(synk): this pad is one extra HBM pass; it is only hit when
        # n_rows is not a multiple of 128/d (never for the module's
        # batch*seq_len row counts).
        flat = jnp.pad(flat, (0, pad))
    n_flat = (n_elems + pad) // LANES
    xf = flat.reshape(n_flat, LANES)      # free reshape (contiguous)

    sub = _sublane_multiple(x2.dtype)
    rows_tile = _pick_rows_tile(n_flat, LANES * itemsize, sub, block_bytes)
    grid = (pl.cdiv(n_flat, rows_tile),)

    lane = jnp.arange(LANES, dtype=jnp.int32)
    seg = (lane[:, None] // d == lane[None, :] // d).astype(jnp.float32)
    w_tiled = jnp.tile(weight.astype(jnp.float32), LANES // d).reshape(1, LANES)

    out = pl.pallas_call(
        functools.partial(_rmsnorm_kernel_flat, inv_d=1.0 / d, eps=eps),
        out_shape=jax.ShapeDtypeStruct((n_flat, LANES), x2.dtype),
        grid_spec=pltpu.PrefetchScalarGridSpec(
            num_scalar_prefetch=0,
            grid=grid,
            in_specs=[
                pl.BlockSpec((rows_tile, LANES), lambda i: (i, 0)),
                pl.BlockSpec((1, LANES), lambda i: (0, 0)),        # resident
                pl.BlockSpec((LANES, LANES), lambda i: (0, 0)),    # resident
            ],
            out_specs=pl.BlockSpec((rows_tile, LANES), lambda i: (i, 0)),
        ),
        compiler_params=pltpu.CompilerParams(dimension_semantics=("parallel",)),
        cost_estimate=_cost(n_elems, d, itemsize),
    )(xf, w_tiled, seg)

    out = out.reshape(-1)
    if pad:
        out = out[:n_elems]
    return out.reshape(n_rows, d)


def _rmsnorm_rows(x2, weight, eps, block_bytes):
    """Natural-layout path (d is a multiple of 128, or the rare fallback)."""
    n_rows, d = x2.shape
    itemsize = jnp.dtype(x2.dtype).itemsize
    sub = _sublane_multiple(x2.dtype)
    rows_tile = _pick_rows_tile(n_rows, d * itemsize, sub, block_bytes)
    grid = (pl.cdiv(n_rows, rows_tile),)
    w2 = weight.reshape(1, d)
    return pl.pallas_call(
        functools.partial(_rmsnorm_kernel_rows, inv_d=1.0 / d, eps=eps),
        out_shape=jax.ShapeDtypeStruct((n_rows, d), x2.dtype),
        grid_spec=pltpu.PrefetchScalarGridSpec(
            num_scalar_prefetch=0,
            grid=grid,
            in_specs=[
                pl.BlockSpec((rows_tile, d), lambda i: (i, 0)),
                pl.BlockSpec((1, d), lambda i: (0, 0)),            # resident
            ],
            out_specs=pl.BlockSpec((rows_tile, d), lambda i: (i, 0)),
        ),
        compiler_params=pltpu.CompilerParams(dimension_semantics=("parallel",)),
        cost_estimate=_cost(n_rows * d, d, itemsize),
    )(x2, w2)


def rmsnorm(x, weight, eps=EPS, block_bytes=_DEFAULT_BLOCK_BYTES):
    """RMSNorm matching models/Mamba.py: x * rsqrt(mean(x^2, -1) + eps) * w."""
    orig_shape = x.shape
    d = orig_shape[-1]
    x2 = x.reshape(-1, d)
    if d % LANES == 0:
        out = _rmsnorm_rows(x2, weight, eps, block_bytes)   # already lane-dense
    elif LANES % d == 0:
        out = _rmsnorm_flat(x2, weight, eps, block_bytes)   # d_model=8 path
    else:
        # TODO(synk): d that neither divides nor is a multiple of 128 uses the
        # natural layout (partially masked lanes); pad d in the caller if hot.
        out = _rmsnorm_rows(x2, weight, eps, block_bytes)
    return out.reshape(orig_shape)


# --------------------------------------------------------------------------
# Self-test
# --------------------------------------------------------------------------

if __name__ == "__main__":
    key = jax.random.PRNGKey(0)

    def ref_rmsnorm(x, w, eps=EPS):
        xf = x.astype(jnp.float32)
        inv = jax.lax.rsqrt(jnp.mean(xf * xf, axis=-1, keepdims=True) + eps)
        return (xf * inv * w.astype(jnp.float32)).astype(x.dtype)

    # Test 1: module-consistent tiny shape (batch=2, seq=8, d_model=8).
    # n_rows=16 -> 128 elements: flat lane-dense path, no padding, one block.
    x1 = jax.random.normal(key, (2, SEQ_LEN_SMALL, D_MODEL), dtype=jnp.float32)
    w1 = jnp.ones((D_MODEL,), dtype=jnp.float32)   # nn.Parameter(torch.ones(d))
    y1 = jax.block_until_ready(rmsnorm(x1, w1))
    assert y1.shape == x1.shape and y1.dtype == x1.dtype
    assert jnp.allclose(y1, ref_rmsnorm(x1, w1), atol=1e-5, rtol=1e-5)

    # Test 2: module seq_len=100, batch=4 -> 400 rows -> 25 lane-rows ->
    # 4 grid steps with a ragged last block (no padding needed).
    x2 = jax.random.normal(jax.random.fold_in(key, 1), (4, 100, D_MODEL),
                           dtype=jnp.float32)
    w2 = jax.random.normal(jax.random.fold_in(key, 2), (D_MODEL,),
                           dtype=jnp.float32)
    y2 = jax.block_until_ready(rmsnorm(x2, w2))
    assert jnp.allclose(y2, ref_rmsnorm(x2, w2), atol=1e-5, rtol=1e-5)

    # Test 3: row count not a multiple of 128/d -> exercises the pad fallback.
    x3 = jax.random.normal(jax.random.fold_in(key, 3), (2, 5, D_MODEL),
                           dtype=jnp.float32)
    y3 = jax.block_until_ready(rmsnorm(x3, w2))
    assert jnp.allclose(y3, ref_rmsnorm(x3, w2), atol=1e-5, rtol=1e-5)

    # Test 4: bf16 stays on the fully-packed flattened path.
    x4 = jax.random.normal(jax.random.fold_in(key, 4), (2, 100, D_MODEL),
                           dtype=jnp.bfloat16)
    w4 = jax.random.normal(jax.random.fold_in(key, 5), (D_MODEL,),
                           dtype=jnp.float32)
    y4 = jax.block_until_ready(rmsnorm(x4, w4))
    assert jnp.allclose(y4.astype(jnp.float32),
                        ref_rmsnorm(x4, w4).astype(jnp.float32),
                        atol=2e-2, rtol=2e-2)

    # Test 5: wide d_model (multiple of 128) -> natural lane-dense path.
    x5 = jax.random.normal(jax.random.fold_in(key, 6), (2, 8, 128),
                           dtype=jnp.float32)
    w5 = jax.random.normal(jax.random.fold_in(key, 7), (128,), dtype=jnp.float32)
    y5 = jax.block_until_ready(rmsnorm(x5, w5))
    assert jnp.allclose(y5, ref_rmsnorm(x5, w5), atol=1e-5, rtol=1e-5)

    print("KERNEL_OK")
</pallas_src>

<mosaic_0001>
module attributes {stable_mosaic.version = 11 : i64} {
  func.func @_rmsnorm_kernel_flat(%arg0: i32, %arg1: memref<1x128xf32, #tpu.memory_space<vmem>>, %arg2: memref<1x128xf32, #tpu.memory_space<vmem>>, %arg3: memref<128x128xf32, #tpu.memory_space<vmem>>, %arg4: memref<1x128xf32, #tpu.memory_space<vmem>>) attributes {dimension_semantics = [#tpu.dimension_semantics<parallel>], iteration_bounds = array<i64: 1>, scalar_prefetch = 0 : i64, scratch_operands = 0 : i64, tpu.core_type = #tpu.core_type<tc>, window_params = [{transform_indices = @transform_0, window_bounds = array<i64: 1, 128>}, {pipeline_mode = #tpu.pipeline_mode<synchronous>, transform_indices = @transform_1, window_bounds = array<i64: 1, 128>}, {pipeline_mode = #tpu.pipeline_mode<synchronous>, transform_indices = @transform_2, window_bounds = array<i64: 128, 128>}, {transform_indices = @transform_3, window_bounds = array<i64: 1, 128>}]} {
    %c0 = arith.constant 0 : index
    %c0_0 = arith.constant 0 : index
    %0 = vector.load %arg1[%c0, %c0_0] : memref<1x128xf32, #tpu.memory_space<vmem>>, vector<1x128xf32>
    %1 = arith.mulf %0, %0 : vector<1x128xf32>
    %c0_1 = arith.constant 0 : index
    %c0_2 = arith.constant 0 : index
    %2 = vector.load %arg3[%c0_1, %c0_2] : memref<128x128xf32, #tpu.memory_space<vmem>>, vector<128x128xf32>
    %cst = arith.constant dense<0.000000e+00> : vector<1x128xf32>
    %3 = tpu.matmul %1, %2, %cst {dimension_numbers = #tpu.dot_dimension_numbers<[1], [0], [0], [1], [0, 0, 1, 1], [], []>} : vector<1x128xf32>, vector<128x128xf32>, vector<1x128xf32> -> vector<1x128xf32>
    %cst_3 = arith.constant 1.250000e-01 : f32
    %4 = vector.broadcast %cst_3 : f32 to vector<1x128xf32>
    %5 = arith.mulf %3, %4 : vector<1x128xf32>
    %cst_4 = arith.constant 9.99999974E-6 : f32
    %6 = vector.broadcast %cst_4 : f32 to vector<1x128xf32>
    %7 = arith.addf %5, %6 : vector<1x128xf32>
    %8 = math.rsqrt %7 : vector<1x128xf32>
    %9 = arith.mulf %0, %8 : vector<1x128xf32>
    %c0_5 = arith.constant 0 : index
    %c0_6 = arith.constant 0 : index
    %10 = vector.load %arg2[%c0_5, %c0_6] : memref<1x128xf32, #tpu.memory_space<vmem>>, vector<1x128xf32>
    %11 = arith.mulf %9, %10 : vector<1x128xf32>
    %c0_7 = arith.constant 0 : index
    %c0_8 = arith.constant 0 : index
    %12 = vector.load %arg4[%c0_7, %c0_8] : memref<1x128xf32, #tpu.memory_space<vmem>>, vector<1x128xf32>
    tpu.vector_store %arg4[%c0_7, %c0_8], %11 {strides = array<i32>} : memref<1x128xf32, #tpu.memory_space<vmem>>, vector<1x128xf32>,
    return
  }
  func.func @transform_0(%arg0: i32) -> (i32, i32) {
    %c0_i32 = arith.constant 0 : i32
    %c0_i32_0 = arith.constant 0 : i32
    return %arg0, %c0_i32 : i32, i32
  }
  func.func @transform_1(%arg0: i32) -> (i32, i32) {
    %c0_i32 = arith.constant 0 : i32
    %c0_i32_0 = arith.constant 0 : i32
    %c0_i32_1 = arith.constant 0 : i32
    return %c0_i32, %c0_i32_0 : i32, i32
  }
  func.func @transform_2(%arg0: i32) -> (i32, i32) {
    %c0_i32 = arith.constant 0 : i32
    %c0_i32_0 = arith.constant 0 : i32
    %c0_i32_1 = arith.constant 0 : i32
    return %c0_i32, %c0_i32_0 : i32, i32
  }
  func.func @transform_3(%arg0: i32) -> (i32, i32) {
    %c0_i32 = arith.constant 0 : i32
    %c0_i32_0 = arith.constant 0 : i32
    return %arg0, %c0_i32 : i32, i32
  }
}

</mosaic_0001>

<llo_original>
// kernel: tpu_custom_call.1
$region0: #{tpu_custom_call.1}
  #allocation0 [shape = 'u32[]', space=smem, size = 0x4, offset = 0x4, fixed_abs, tag = 'smem constant byte address 0x4 - core index']
  #allocation1 [shape = 'u32[144,128]{1,0:T(1,128)}', space=vmem, size = 0x12000, scoped, tag = 'internal scratch']
  %s0 = inlined_call_operand.hbm [shape: f32[1,128], index: 0, kind: input, shape index: {}]
  %s1 = inlined_call_operand.vmem [shape: f32[1,128], index: 1, kind: input, shape index: {}]
  %s2 = inlined_call_operand.hbm [shape: f32[128,128], index: 2, kind: input, shape index: {}]
  %s3 = inlined_call_operand.hbm [shape: f32[1,128], index: 3, kind: output, shape index: {}]
  %s4 = sld [smem:[#allocation0]]
  $region30: #{tpu_custom_call.1} parent=0
    _
  %s6 = ssub.s32 1, %s4
  %s7 = scalar_select 0, %s6, %s4
  $region1: #{tpu_custom_call.1} parent=0
    #allocation2 [shape = 'u8[512]{0}', space=vmem, size = 0x400, scoped, tag = 'input window, operand 0, single buffered']
    #allocation3 [shape = 's32[1]{0}', space=sflag, size = 0x4, scoped, tag = 'scoped memory for tpu_custom_call.1']
    #allocation4 [shape = 's32[1]{0}', space=sflag, size = 0x4, scoped, tag = 'scoped memory for tpu_custom_call.1']
    #allocation5 [shape = 'u8[65536]{0}', space=vmem, size = 0x10000, scoped, tag = 'input window, operand 2, single buffered']
    #allocation6 [shape = 's32[1]{0}', space=sflag, size = 0x4, scoped, tag = 'scoped memory for tpu_custom_call.1']
    #allocation7 [shape = 'u8[512]{0}', space=vmem, size = 0x400, scoped, tag = 'output window, operand 0, single buffered']
    %8 = vsyncpa [#allocation3], 0
    %9 = vsyncpa [#allocation6], 0
    %10 = vsyncpa [#allocation4], 0
    // Predicated region
    $region2: #{tpu_custom_call.1} parent=1 // pred_check
      _
    $region3: #{tpu_custom_call.1} parent=1 // pred_check_branch
      %12 = sbr.rel (0) target = $region5
    $region4: #{tpu_custom_call.1} parent=1 // pred_region
      %s14 = ssub.s32 16, 16
      %15 = vsyncadd [#allocation3], %s14
      %s17 = sshll.u32 [#allocation2], 4
      %s18 = int_to_ptr.vmem [resolvable:$true] %s17
      %20 = dma.hbm_to_vmem [thread:$0]  %s0, 16, %s18, [#allocation3]
    $region5: #{tpu_custom_call.1} parent=1 // pred_fallthru
      _
    // Predicated region
    $region6: #{tpu_custom_call.1} parent=1 // pred_check
      _
    $region7: #{tpu_custom_call.1} parent=1 // pred_check_branch
      %22 = sbr.rel (0) target = $region9
    $region8: #{tpu_custom_call.1} parent=1 // pred_region
      _
    $region9: #{tpu_custom_call.1} parent=1 // pred_fallthru
      _
    // Predicated region
    $region10: #{tpu_custom_call.1} parent=1 // pred_check
      _
    $region11: #{tpu_custom_call.1} parent=1 // pred_check_branch
      %24 = sbr.rel (0) target = $region13
    $region12: #{tpu_custom_call.1} parent=1 // pred_region
      %s26 = ssub.s32 2048, 2048
      %27 = vsyncadd [#allocation6], %s26
      %s28 = sshll.u32 [#allocation5], 4
      %s29 = int_to_ptr.vmem [resolvable:$true] %s28
      %34 = dma.hbm_to_vmem [thread:$0]  %s2, 2048, %s29, [#allocation6], 128, 128, 8
    $region13: #{tpu_custom_call.1} parent=1 // pred_fallthru
      _
    // Predicated region
    $region14: #{tpu_custom_call.1} parent=1 // pred_check
      _
    $region15: #{tpu_custom_call.1} parent=1 // pred_check_branch
      %36 = sbr.rel (0) target = $region17
    $region16: #{tpu_custom_call.1} parent=1 // pred_region
      %37 = dma.done [#allocation3], 16
    $region17: #{tpu_custom_call.1} parent=1 // pred_fallthru
      _
    // Predicated region
    $region18: #{tpu_custom_call.1} parent=1 // pred_check
      _
    $region19: #{tpu_custom_call.1} parent=1 // pred_check_branch
      %39 = sbr.rel (0) target = $region21
    $region20: #{tpu_custom_call.1} parent=1 // pred_region
      %40 = dma.done [#allocation6], 2048
    $region21: #{tpu_custom_call.1} parent=1 // pred_fallthru
      _
    %v41 = vld [vmem:[#allocation2] sm:$0x1]
    %v42 = vmul.f32 %v41, %v41
    %v43 = vld [vmem:[#allocation5] sm:$0xff]
    %v44 = vld [vmem:[#allocation5 + $0x8] sm:$0xff]
    %v45 = vld [vmem:[#allocation5 + $0x10] sm:$0xff]
    %v46 = vld [vmem:[#allocation5 + $0x18] sm:$0xff]
    %v47 = vld [vmem:[#allocation5 + $0x20] sm:$0xff]
    %v48 = vld [vmem:[#allocation5 + $0x28] sm:$0xff]
    %v49 = vld [vmem:[#allocation5 + $0x30] sm:$0xff]
    %v50 = vld [vmem:[#allocation5 + $0x38] sm:$0xff]
    %v51 = vld [vmem:[#allocation5 + $0x40] sm:$0xff]
    %v52 = vld [vmem:[#allocation5 + $0x48] sm:$0xff]
    %v53 = vld [vmem:[#allocation5 + $0x50] sm:$0xff]
    %v54 = vld [vmem:[#allocation5 + $0x58] sm:$0xff]
    %v55 = vld [vmem:[#allocation5 + $0x60] sm:$0xff]
    %v56 = vld [vmem:[#allocation5 + $0x68] sm:$0xff]
    %v57 = vld [vmem:[#allocation5 + $0x70] sm:$0xff]
    %v58 = vld [vmem:[#allocation5 + $0x78] sm:$0xff]
    %59 = vmatprep.subr.mxu0 0.0
    %60 = vmatpush1.msra.mxu0 %v43
    %61 = vmatprep.subr.mxu0 0.0
    %62 = vmatpush1.msra.mxu0 %v44
    %63 = vmatprep.subr.mxu0 0.0
    %64 = vmatpush1.msra.mxu0 %v45
    %65 = vmatprep.subr.mxu0 0.0
    %66 = vmatpush1.msra.mxu0 %v46
    %67 = vmatprep.subr.mxu0 0.0
    %68 = vmatpush1.msra.mxu0 %v47
    %69 = vmatprep.subr.mxu0 0.0
    %70 = vmatpush1.msra.mxu0 %v48
    %71 = vmatprep.subr.mxu0 0.0
    %72 = vmatpush1.msra.mxu0 %v49
    %73 = vmatprep.subr.mxu0 0.0
    %74 = vmatpush1.msra.mxu0 %v50
    %75 = vmatprep.subr.mxu0 0.0
    %76 = vmatpush1.msra.mxu0 %v51
    %77 = vmatprep.subr.mxu0 0.0
    %78 = vmatpush1.msra.mxu0 %v52
    %79 = vmatprep.subr.mxu0 0.0
    %80 = vmatpush1.msra.mxu0 %v53
    %81 = vmatprep.subr.mxu0 0.0
    %82 = vmatpush1.msra.mxu0 %v54
    %83 = vmatprep.subr.mxu0 0.0
    %84 = vmatpush1.msra.mxu0 %v55
    %85 = vmatprep.subr.mxu0 0.0
    %86 = vmatpush1.msra.mxu0 %v56
    %87 = vmatprep.subr.mxu0 0.0
    %88 = vmatpush1.msra.mxu0 %v57
    %89 = vmatprep.subr.mxu0 0.0
    %90 = vmatpush1.msra.mxu0 %v58
    %91 = vmatprep.subr.mxu0 0.0
    %92 = vmatpush1.msra.mxu0 0.0
    %93 = vmatprep.subr.mxu0 0.0
    %94 = vmatpush1.msra.mxu0 0.0
    %95 = vmatprep.subr.mxu0 0.0
    %96 = vmatpush1.msra.mxu0 0.0
    %97 = vmatprep.subr.mxu0 0.0
    %98 = vmatpush1.msra.mxu0 0.0
    %99 = vmatprep.subr.mxu0 0.0
    %100 = vmatpush1.msra.mxu0 0.0
    %101 = vmatprep.subr.mxu0 0.0
    %102 = vmatpush1.msra.mxu0 0.0
    %103 = vmatprep.subr.mxu0 0.0
    %104 = vmatpush1.msra.mxu0 0.0
    %105 = vmatprep.subr.mxu0 0.0
    %106 = vmatpush1.msra.mxu0 0.0
    %107 = vmatprep.subr.mxu0 0.0
    %108 = vmatpush1.msra.mxu0 0.0
    %109 = vmatprep.subr.mxu0 0.0
    %110 = vmatpush1.msra.mxu0 0.0
    %111 = vmatprep.subr.mxu0 0.0
    %112 = vmatpush1.msra.mxu0 0.0
    %113 = vmatprep.subr.mxu0 0.0
    %114 = vmatpush1.msra.mxu0 0.0
    %115 = vmatprep.subr.mxu0 0.0
    %116 = vmatpush1.msra.mxu0 0.0
    %117 = vmatprep.subr.mxu0 0.0
    %118 = vmatpush1.msra.mxu0 0.0
    %119 = vmatprep.subr.mxu0 0.0
    %120 = vmatpush1.msra.mxu0 0.0
    %121 = vmatprep.subr.mxu0 0.0
    %122 = vmatpush1.msra.mxu0 0.0
    %123 = vmatprep.mubr.f32.mxu0 0.0
    %124 = vmatmul.mubr.f32.gmra.mrb[0].mxu0 %v42
    %v125 = vpop.f32.mrb[0].mxu0
    %v126 = vadd.f32 0.0, %v125
    %v127 = vpop.f32.mrb[0].mxu0
    %128 = vdwg.mxu0
    %v129 = vmul.f32 %v126, 0.125
    %v130 = vadd.f32 %v129, 1e-05
    %v131 = vrsqrt.pop %v130
    %v132 = vmul.f32 %v41, %v131
    %v133 = vld [vmem:[%s1] sm:$0x1]
    %v134 = vmul.f32 %v132, %v133
    %135 = vst [vmem:[#allocation7] sm:$0x1] %v134
    // Predicated region
    $region22: #{tpu_custom_call.1} parent=1 // pred_check
      _
    $region23: #{tpu_custom_call.1} parent=1 // pred_check_branch
      %137 = sbr.rel (0) target = $region25
    $region24: #{tpu_custom_call.1} parent=1 // pred_region
      %s139 = ssub.s32 16, 16
      %140 = vsyncadd [#allocation4], %s139
      %s142 = sshll.u32 [#allocation7], 4
      %s143 = int_to_ptr.vmem [resolvable:$true] %s142
      %145 = dma.vmem_to_hbm [thread:$0]  %s143, 16, %s3, [#allocation4]
    $region25: #{tpu_custom_call.1} parent=1 // pred_fallthru
      _
    // Predicated region
    $region26: #{tpu_custom_call.1} parent=1 // pred_check
      _
    $region27: #{tpu_custom_call.1} parent=1 // pred_check_branch
      %147 = sbr.rel (0) target = $region29
    $region28: #{tpu_custom_call.1} parent=1 // pred_region
      %148 = dma.done [#allocation4], 16
    $region29: #{tpu_custom_call.1} parent=1 // pred_fallthru
      _
    %149 = vsyncpa [#allocation3], 1
    %150 = vsyncpa [#allocation6], 1
    %151 = vsyncpa [#allocation4], 1

</llo_original>
